<compile_context>
chip_gen: v5e
topology: v5e:2x2
jax: 0.10.0
libtpu: 0.0.40
codegen_flags: <defaults>
</compile_context>

<pallas_src>
import functools
import math

import jax
import jax.numpy as jnp
from jax.experimental import pallas as pl
from jax.experimental.pallas import tpu as pltpu


def mlp_kernel(x_ref, w1_ref, b1_ref, w2_ref, b2_ref, o_ref, acc_ref, *,
               exact_gelu):
    h_idx = pl.program_id(1)

    @pl.when(h_idx == 0)
    def _():
        acc_ref[...] = jnp.zeros_like(acc_ref)

    # fc_1 slab: (tm, D) @ (D, th) -> f32, + b1 slab (1, th)
    h = jnp.dot(x_ref[...], w1_ref[...],
                preferred_element_type=jnp.float32) + b1_ref[...]

    if exact_gelu:
        # F.gelu default (exact, erf-based)
        g = 0.5 * h * (1.0 + jax.lax.erf(h * (1.0 / math.sqrt(2.0))))
    else:
        # tanh approximation (single EUP op path; ~1e-3 difference vs erf)
        c = math.sqrt(2.0 / math.pi)
        g = 0.5 * h * (1.0 + jnp.tanh(c * (h + 0.044715 * h * h * h)))

    # fc_2 partial: accumulate (tm, th) @ (th, D) into f32 scratch.
    acc_ref[...] += jnp.dot(g.astype(w2_ref.dtype), w2_ref[...],
                            preferred_element_type=jnp.float32)

    @pl.when(h_idx == pl.num_programs(1) - 1)
    def _():
        # bias b2 added once per output tile (finalize), dropout == identity.
        o_ref[...] = (acc_ref[...] + b2_ref[...]).astype(o_ref.dtype)


def _pick_tm(M, target=256):
    if M >= target:
        return target
    return max(8, ((M + 7) // 8) * 8)


def _pick_th(H):
    for cand in (512, 256, 128):
        if H % cand == 0:
            return cand
    return H  # full-extent block is always legal


def _vmem_bytes(tm, th, D, operand_itemsize, out_itemsize):
    # double-buffered inputs/outputs + resident f32 accumulator + headroom
    x_b = 2 * tm * D * operand_itemsize
    w1_b = 2 * D * th * operand_itemsize
    w2_b = 2 * th * D * operand_itemsize
    b1_b = 2 * th * 4
    b2_b = 2 * D * 4
    out_b = 2 * tm * D * out_itemsize
    acc_b = tm * D * 4
    inter_b = tm * th * 4  # (tm, th) GELU intermediate
    return x_b + w1_b + w2_b + b1_b + b2_b + out_b + acc_b + inter_b


def mlp_pallas(x, w1, b1, w2, b2, *, tm=None, th=None, exact_gelu=True,
               use_bf16=True):
    B, T, D = x.shape
    H = w1.shape[1]
    M = B * T
    out_dtype = x.dtype

    if tm is None:
        tm = _pick_tm(M)
    if th is None:
        th = _pick_th(H)
    assert H % th == 0
    assert th == H or th % 128 == 0
    assert tm % 8 == 0

    m_blocks = pl.cdiv(M, tm)
    Mpad = m_blocks * tm

    xf = x.reshape(M, D)
    if Mpad != M:
        # tail handling: zero-pad rows (independent rows, sliced off below)
        xf = jnp.pad(xf, ((0, Mpad - M), (0, 0)))

    operand_dtype = jnp.bfloat16 if use_bf16 else x.dtype
    xf = xf.astype(operand_dtype)
    w1c = w1.astype(operand_dtype)
    w2c = w2.astype(operand_dtype)
    b1c = b1.reshape(1, H).astype(jnp.float32)
    b2c = b2.reshape(1, D).astype(jnp.float32)

    needed = _vmem_bytes(tm, th, D,
                         jnp.dtype(operand_dtype).itemsize,
                         jnp.dtype(out_dtype).itemsize)
    vmem_limit = None
    if 2 * needed > (32 << 20):
        # explicit budget (v7x has 64 MiB physical VMEM per TC)
        vmem_limit = int(min(2 * needed, 64 << 20))

    out = pl.pallas_call(
        functools.partial(mlp_kernel, exact_gelu=exact_gelu),
        out_shape=jax.ShapeDtypeStruct((Mpad, D), out_dtype),
        grid_spec=pltpu.PrefetchScalarGridSpec(
            num_scalar_prefetch=0,
            grid=(m_blocks, H // th),
            in_specs=[
                pl.BlockSpec((tm, D), lambda i, h: (i, 0)),   # x tile
                pl.BlockSpec((D, th), lambda i, h: (0, h)),   # W1 slab
                pl.BlockSpec((1, th), lambda i, h: (0, h)),   # b1 slab
                pl.BlockSpec((th, D), lambda i, h: (h, 0)),   # W2 slab
                pl.BlockSpec((1, D), lambda i, h: (0, 0)),    # b2
            ],
            out_specs=pl.BlockSpec((tm, D), lambda i, h: (i, 0)),
            scratch_shapes=[pltpu.VMEM((tm, D), jnp.float32)],
        ),
        compiler_params=pltpu.CompilerParams(
            dimension_semantics=("parallel", "arbitrary"),
            vmem_limit_bytes=vmem_limit),
    )(xf, w1c, b1c, w2c, b2c)

    return out[:M].reshape(B, T, D)


def mlp_ref(x, w1, b1, w2, b2, *, exact_gelu=True, compute_dtype=None):
    cdt = compute_dtype if compute_dtype is not None else x.dtype
    xc, w1c, w2c = x.astype(cdt), w1.astype(cdt), w2.astype(cdt)
    h = jnp.einsum("btd,dh->bth", xc, w1c,
                   preferred_element_type=jnp.float32) + b1.astype(jnp.float32)
    if exact_gelu:
        g = 0.5 * h * (1.0 + jax.lax.erf(h / math.sqrt(2.0)))
    else:
        c = math.sqrt(2.0 / math.pi)
        g = 0.5 * h * (1.0 + jnp.tanh(c * (h + 0.044715 * h ** 3)))
    y = jnp.einsum("bth,hd->btd", g.astype(cdt), w2c,
                   preferred_element_type=jnp.float32) + b2.astype(jnp.float32)
    return y.astype(x.dtype)


if __name__ == "__main__":
    # config: n_embd=128 (lane-dense), hidden=512, bias=True, dropout=0.0.
    # B*T = 24 deliberately not a multiple of tm to exercise tail padding;
    # th=128 exercises the H-axis reduction/accumulator path.
    B, T, D = 2, 12, 128
    H = 4 * D

    key = jax.random.PRNGKey(0)
    kx, k1, k2, k3, k4 = jax.random.split(key, 5)
    x = jax.random.normal(kx, (B, T, D), dtype=jnp.float32)
    # synthetic parameters (shapes match nn.Linear weight.T layout)
    w1 = jax.random.normal(k1, (D, H), dtype=jnp.float32) * (1.0 / math.sqrt(D))
    b1 = jax.random.normal(k2, (H,), dtype=jnp.float32) * 0.02
    w2 = jax.random.normal(k3, (H, D), dtype=jnp.float32) * (1.0 / math.sqrt(H))
    b2 = jax.random.normal(k4, (D,), dtype=jnp.float32) * 0.02

    # f32 operand path: strict match against the exact-erf reference.
    out_f32 = mlp_pallas(x, w1, b1, w2, b2, tm=16, th=128, use_bf16=False)
    jax.block_until_ready(out_f32)
    ref_f32 = mlp_ref(x, w1, b1, w2, b2)
    assert out_f32.shape == (B, T, D)
    err_f32 = float(jnp.max(jnp.abs(out_f32 - ref_f32)))
    assert jnp.allclose(out_f32, ref_f32, atol=1e-4, rtol=1e-4), err_f32

    # bf16 operand path (default perf config): compare against a reference
    # that applies the same bf16 operand casts (f32 MXU accumulation).
    out_bf16 = mlp_pallas(x, w1, b1, w2, b2, tm=16, th=128, use_bf16=True)
    jax.block_until_ready(out_bf16)
    ref_bf16 = mlp_ref(x, w1, b1, w2, b2, compute_dtype=jnp.bfloat16)
    err_bf16 = float(jnp.max(jnp.abs(out_bf16 - ref_bf16)))
    assert jnp.allclose(out_bf16, ref_bf16, atol=2e-2, rtol=2e-2), err_bf16

    print("KERNEL_OK")
</pallas_src>

<mosaic_0001>
module attributes {stable_mosaic.version = 11 : i64} {
  func.func @mlp_kernel(%arg0: i32, %arg1: i32, %arg2: memref<16x128xf32, #tpu.memory_space<vmem>>, %arg3: memref<128x128xf32, #tpu.memory_space<vmem>>, %arg4: memref<1x128xf32, #tpu.memory_space<vmem>>, %arg5: memref<128x128xf32, #tpu.memory_space<vmem>>, %arg6: memref<1x128xf32, #tpu.memory_space<vmem>>, %arg7: memref<16x128xf32, #tpu.memory_space<vmem>>, %arg8: memref<16x128xf32, #tpu.memory_space<vmem>>) attributes {dimension_semantics = [#tpu.dimension_semantics<parallel>, #tpu.dimension_semantics<arbitrary>], iteration_bounds = array<i64: 2, 4>, scalar_prefetch = 0 : i64, scratch_operands = 1 : i64, tpu.core_type = #tpu.core_type<tc>, window_params = [{transform_indices = @transform_0, window_bounds = array<i64: 16, 128>}, {transform_indices = @transform_1, window_bounds = array<i64: 128, 128>}, {transform_indices = @transform_2, window_bounds = array<i64: 1, 128>}, {transform_indices = @transform_3, window_bounds = array<i64: 128, 128>}, {pipeline_mode = #tpu.pipeline_mode<synchronous>, transform_indices = @transform_4, window_bounds = array<i64: 1, 128>}, {transform_indices = @transform_5, window_bounds = array<i64: 16, 128>}]} {
    %c0_i32 = arith.constant 0 : i32
    %0 = arith.cmpi eq, %arg1, %c0_i32 : i32
    %1 = arith.extui %0 : i1 to i32
    %c0_i32_0 = arith.constant 0 : i32
    %2 = arith.cmpi ne, %1, %c0_i32_0 : i32
    scf.if %2 {
      %cst_17 = arith.constant 0.000000e+00 : f32
      %25 = vector.broadcast %cst_17 : f32 to vector<16x128xf32>
      %c0_18 = arith.constant 0 : index
      %c0_19 = arith.constant 0 : index
      %26 = vector.load %arg8[%c0_18, %c0_19] : memref<16x128xf32, #tpu.memory_space<vmem>>, vector<16x128xf32>
      tpu.vector_store %arg8[%c0_18, %c0_19], %25 {strides = array<i32>} : memref<16x128xf32, #tpu.memory_space<vmem>>, vector<16x128xf32>,
    } else {
    }
    %c0 = arith.constant 0 : index
    %c0_1 = arith.constant 0 : index
    %3 = vector.load %arg2[%c0, %c0_1] : memref<16x128xf32, #tpu.memory_space<vmem>>, vector<16x128xf32>
    %c0_2 = arith.constant 0 : index
    %c0_3 = arith.constant 0 : index
    %4 = vector.load %arg3[%c0_2, %c0_3] : memref<128x128xf32, #tpu.memory_space<vmem>>, vector<128x128xf32>
    %cst = arith.constant dense<0.000000e+00> : vector<16x128xf32>
    %5 = tpu.matmul %3, %4, %cst {dimension_numbers = #tpu.dot_dimension_numbers<[1], [0], [0], [1], [0, 0, 1, 1], [], []>} : vector<16x128xf32>, vector<128x128xf32>, vector<16x128xf32> -> vector<16x128xf32>
    %c0_4 = arith.constant 0 : index
    %c0_5 = arith.constant 0 : index
    %6 = vector.load %arg4[%c0_4, %c0_5] : memref<1x128xf32, #tpu.memory_space<vmem>>, vector<1x128xf32>
    %7 = vector.broadcast %6 : vector<1x128xf32> to vector<16x128xf32>
    %8 = arith.addf %5, %7 : vector<16x128xf32>
    %cst_6 = arith.constant 5.000000e-01 : f32
    %9 = vector.broadcast %cst_6 : f32 to vector<16x128xf32>
    %10 = arith.mulf %9, %8 : vector<16x128xf32>
    %cst_7 = arith.constant 0.707106769 : f32
    %11 = vector.broadcast %cst_7 : f32 to vector<16x128xf32>
    %12 = arith.mulf %8, %11 : vector<16x128xf32>
    %13 = math.erf %12 : vector<16x128xf32>
    %cst_8 = arith.constant 1.000000e+00 : f32
    %14 = vector.broadcast %cst_8 : f32 to vector<16x128xf32>
    %15 = arith.addf %14, %13 : vector<16x128xf32>
    %16 = arith.mulf %10, %15 : vector<16x128xf32>
    %c0_9 = arith.constant 0 : index
    %c0_10 = arith.constant 0 : index
    %17 = vector.load %arg8[%c0_9, %c0_10] : memref<16x128xf32, #tpu.memory_space<vmem>>, vector<16x128xf32>
    %c0_11 = arith.constant 0 : index
    %c0_12 = arith.constant 0 : index
    %18 = vector.load %arg5[%c0_11, %c0_12] : memref<128x128xf32, #tpu.memory_space<vmem>>, vector<128x128xf32>
    %cst_13 = arith.constant dense<0.000000e+00> : vector<16x128xf32>
    %19 = tpu.matmul %16, %18, %cst_13 {dimension_numbers = #tpu.dot_dimension_numbers<[1], [0], [0], [1], [0, 0, 1, 1], [], []>} : vector<16x128xf32>, vector<128x128xf32>, vector<16x128xf32> -> vector<16x128xf32>
    %20 = arith.addf %17, %19 : vector<16x128xf32>
    %c0_14 = arith.constant 0 : index
    %c0_15 = arith.constant 0 : index
    %21 = vector.load %arg8[%c0_14, %c0_15] : memref<16x128xf32, #tpu.memory_space<vmem>>, vector<16x128xf32>
    tpu.vector_store %arg8[%c0_14, %c0_15], %20 {strides = array<i32>} : memref<16x128xf32, #tpu.memory_space<vmem>>, vector<16x128xf32>,
    %c3_i32 = arith.constant 3 : i32
    %22 = arith.cmpi eq, %arg1, %c3_i32 : i32
    %23 = arith.extui %22 : i1 to i32
    %c0_i32_16 = arith.constant 0 : i32
    %24 = arith.cmpi ne, %23, %c0_i32_16 : i32
    scf.if %24 {
      %c0_17 = arith.constant 0 : index
      %c0_18 = arith.constant 0 : index
      %25 = vector.load %arg8[%c0_17, %c0_18] : memref<16x128xf32, #tpu.memory_space<vmem>>, vector<16x128xf32>
      %c0_19 = arith.constant 0 : index
      %c0_20 = arith.constant 0 : index
      %26 = vector.load %arg6[%c0_19, %c0_20] : memref<1x128xf32, #tpu.memory_space<vmem>>, vector<1x128xf32>
      %27 = vector.broadcast %26 : vector<1x128xf32> to vector<16x128xf32>
      %28 = arith.addf %25, %27 : vector<16x128xf32>
      %c0_21 = arith.constant 0 : index
      %c0_22 = arith.constant 0 : index
      %29 = vector.load %arg7[%c0_21, %c0_22] : memref<16x128xf32, #tpu.memory_space<vmem>>, vector<16x128xf32>
      tpu.vector_store %arg7[%c0_21, %c0_22], %28 {strides = array<i32>} : memref<16x128xf32, #tpu.memory_space<vmem>>, vector<16x128xf32>,
    } else {
    }
    return
  }
  func.func @transform_0(%arg0: i32, %arg1: i32) -> (i32, i32) {
    %c0_i32 = arith.constant 0 : i32
    %c0_i32_0 = arith.constant 0 : i32
    return %arg0, %c0_i32 : i32, i32
  }
  func.func @transform_1(%arg0: i32, %arg1: i32) -> (i32, i32) {
    %c0_i32 = arith.constant 0 : i32
    %c0_i32_0 = arith.constant 0 : i32
    return %c0_i32, %arg1 : i32, i32
  }
  func.func @transform_2(%arg0: i32, %arg1: i32) -> (i32, i32) {
    %c0_i32 = arith.constant 0 : i32
    %c0_i32_0 = arith.constant 0 : i32
    return %c0_i32, %arg1 : i32, i32
  }
  func.func @transform_3(%arg0: i32, %arg1: i32) -> (i32, i32) {
    %c0_i32 = arith.constant 0 : i32
    %c0_i32_0 = arith.constant 0 : i32
    return %arg1, %c0_i32 : i32, i32
  }
  func.func @transform_4(%arg0: i32, %arg1: i32) -> (i32, i32) {
    %c0_i32 = arith.constant 0 : i32
    %c0_i32_0 = arith.constant 0 : i32
    %c0_i32_1 = arith.constant 0 : i32
    return %c0_i32, %c0_i32_0 : i32, i32
  }
  func.func @transform_5(%arg0: i32, %arg1: i32) -> (i32, i32) {
    %c0_i32 = arith.constant 0 : i32
    %c0_i32_0 = arith.constant 0 : i32
    return %arg0, %c0_i32 : i32, i32
  }
}

</mosaic_0001>

<llo_original>
// kernel: tpu_custom_call.1
$region0: #{tpu_custom_call.1}
  #allocation0 [shape = 'u32[]', space=smem, size = 0x4, offset = 0x4, fixed_abs, tag = 'smem constant byte address 0x4 - core index']
  #allocation1 [shape = 'u32[72,128]{1,0:T(1,128)}', space=vmem, size = 0x9000, scoped, tag = 'internal scratch']
  #allocation2 [shape = 'f32[16,128]{1,0:T(8,128)}', space=vmem, size = 0x2000, scoped, tag = 'scratch operand']
  %s0 = inlined_call_operand.hbm [shape: f32[32,128], index: 0, kind: input, shape index: {}]
  %s1 = inlined_call_operand.hbm [shape: f32[128,512], index: 1, kind: input, shape index: {}]
  %s2 = inlined_call_operand.hbm [shape: f32[1,512], index: 2, kind: input, shape index: {}]
  %s3 = inlined_call_operand.hbm [shape: f32[512,128], index: 3, kind: input, shape index: {}]
  %s4 = inlined_call_operand.vmem [shape: f32[1,128], index: 4, kind: input, shape index: {}]
  %s5 = inlined_call_operand.hbm [shape: f32[32,128], index: 5, kind: output, shape index: {}]
  %s6 = sld [smem:[#allocation0]]
  $region77: #{tpu_custom_call.1} parent=0
    _
  %s8 = ssub.s32 1, %s6
  %s9 = scalar_select 0, %s8, %s6
  $region1: #{tpu_custom_call.1} parent=0
    #allocation3 [shape = 'u8[16384]{0}', space=vmem, size = 0x4000, scoped, tag = 'input window, operand 0']
    #allocation4 [shape = 's32[2]{0}', space=sflag, size = 0x8, scoped, tag = 'scoped memory for tpu_custom_call.1']
    #allocation5 [shape = 's32[2]{0}', space=sflag, size = 0x8, scoped, tag = 'scoped memory for tpu_custom_call.1']
    #allocation6 [shape = 'u8[131072]{0}', space=vmem, size = 0x20000, scoped, tag = 'input window, operand 1']
    #allocation7 [shape = 's32[2]{0}', space=sflag, size = 0x8, scoped, tag = 'scoped memory for tpu_custom_call.1']
    #allocation8 [shape = 'u8[1024]{0}', space=vmem, size = 0x400, scoped, tag = 'input window, operand 2']
    #allocation9 [shape = 'u8[131072]{0}', space=vmem, size = 0x20000, scoped, tag = 'input window, operand 3']
    #allocation10 [shape = 's32[2]{0}', space=sflag, size = 0x8, scoped, tag = 'scoped memory for tpu_custom_call.1']
    #allocation11 [shape = 'u8[16384]{0}', space=vmem, size = 0x4000, scoped, tag = 'output window, operand 0']
    %10 = vsyncpa [#allocation4], 0
    %s11 = scalar_lea.sflag [#allocation4], 1
    %12 = vsyncpa %s11, 0
    %13 = vsyncpa [#allocation7], 0
    %s14 = scalar_lea.sflag [#allocation7], 1
    %15 = vsyncpa %s14, 0
    %16 = vsyncpa [#allocation10], 0
    %s17 = scalar_lea.sflag [#allocation10], 1
    %18 = vsyncpa %s17, 0
    %19 = vsyncpa [#allocation5], 0
    %s20 = scalar_lea.sflag [#allocation5], 1
    %21 = vsyncpa %s20, 0
    loop: start=0, step=1, limit=10
    $region2: #{tpu_custom_call.1} parent=1 // loop_pre_header
      _
    $region3: #{tpu_custom_call.1} parent=1 // loop_header
      %s23 = sphi 0, %s27
      %p24 = scmp.ge.s32.totalorder %s23, 10
      %s30 = sphi 0, %s42
      %s31 = sphi 0, %s38
      %s32 = sphi 0, %s30
      %s33 = sphi 0, %s31
      %s34 = sphi 0, %s32
      %s35 = sphi 0, %s33
      %s45 = sphi 0, %s47
      %s48 = sphi 0, %s45
      %s49 = sphi 0, %s48
      %s65 = sphi 0, %s49
      %s71 = sphi 0, %s73
      %s74 = sphi 0, %s71
      %s75 = sphi 0, %s74
      %s91 = sphi 0, %s75
      %s97 = sphi 0, %s99
      %s100 = sphi 0, %s97
      %s101 = sphi 0, %s100
      %s117 = sphi 0, %s101
      %s123 = sphi 0, %s125
      %s126 = sphi 0, %s123
      %s127 = sphi 0, %s126
      %s143 = sphi 0, %s127
      %s147 = sphi 0, %s147
      %s149 = sphi 0, %s147
      %s150 = sphi 0, %s149
      %s164 = sphi 0, %s150
      %s170 = sphi 0, %s172
      %s173 = sphi 0, %s170
      %s174 = sphi 0, %s173
      %s190 = sphi 0, %s174
    $region4: #{tpu_custom_call.1} parent=1 // loop_header_branch
      %26 = sbr.rel (%p24) target = $region8
    $region5: #{tpu_custom_call.1} parent=1 // loop_body
      %s28 = ssub.s32 %s23, 1
      %s29 = ssub.s32 %s23, 2
      %s36 = sadd.s32 1, %s31
      %p37 = scmp.ge.s32.totalorder %s36, 4
      %s38 = scalar_select %p37, 0, %s36
      %s39 = sadd.s32 1, %s30
      %s40 = scalar_select %p37, %s39, %s30
      %p41 = scmp.ge.s32.totalorder %s40, 2
      %s42 = scalar_select %p41, 0, %s40
      %s43 = ssub.s32 %s30, %s42
      %p44 = scmp.eq.s32.totalorder %s43, 0
      %s46 = sadd.s32 %s45, 1
      %s47 = scalar_select %p44, %s45, %s46
      %p50 = pneg %p44
      %p51 = scmp.eq.s32.totalorder %s23, 7
      %p52 = por %p50, %p51
      %p53 = scmp.ne.s32.totalorder %s45, %s48
      %p54 = scmp.eq.s32.totalorder %s23, 0
      %p55 = por %p53, %p54
      %p56 = scmp.ne.s32.totalorder %s45, %s48
      %p57 = scmp.eq.s32.totalorder %s28, 7
      %p58 = por %p56, %p57
      %p59 = scmp.ne.s32.totalorder %s48, %s49
      %p60 = scmp.eq.s32.totalorder %s28, 0
      %p61 = por %p59, %p60
      %p62 = scmp.ne.s32.totalorder %s48, %s49
      %p63 = scmp.eq.s32.totalorder %s29, 7
      %p64 = por %p62, %p63
      %p66 = scmp.ne.s32.totalorder %s49, %s65
      %p67 = scmp.eq.s32.totalorder %s29, 0
      %p68 = por %p66, %p67
      %s69 = ssub.s32 %s31, %s38
      %p70 = scmp.eq.s32.totalorder %s69, 0
      %s72 = sadd.s32 %s71, 1
      %s73 = scalar_select %p70, %s71, %s72
      %p76 = pneg %p70
      %p77 = scmp.eq.s32.totalorder %s23, 7
      %p78 = por %p76, %p77
      %p79 = scmp.ne.s32.totalorder %s71, %s74
      %p80 = scmp.eq.s32.totalorder %s23, 0
      %p81 = por %p79, %p80
      %p82 = scmp.ne.s32.totalorder %s71, %s74
      %p83 = scmp.eq.s32.totalorder %s28, 7
      %p84 = por %p82, %p83
      %p85 = scmp.ne.s32.totalorder %s74, %s75
      %p86 = scmp.eq.s32.totalorder %s28, 0
      %p87 = por %p85, %p86
      %p88 = scmp.ne.s32.totalorder %s74, %s75
      %p89 = scmp.eq.s32.totalorder %s29, 7
      %p90 = por %p88, %p89
      %p92 = scmp.ne.s32.totalorder %s75, %s91
      %p93 = scmp.eq.s32.totalorder %s29, 0
      %p94 = por %p92, %p93
      %s95 = ssub.s32 %s31, %s38
      %p96 = scmp.eq.s32.totalorder %s95, 0
      %s98 = sadd.s32 %s97, 1
      %s99 = scalar_select %p96, %s97, %s98
      %p102 = pneg %p96
      %p103 = scmp.eq.s32.totalorder %s23, 7
      %p104 = por %p102, %p103
      %p105 = scmp.ne.s32.totalorder %s97, %s100
      %p106 = scmp.eq.s32.totalorder %s23, 0
      %p107 = por %p105, %p106
      %p108 = scmp.ne.s32.totalorder %s97, %s100
      %p109 = scmp.eq.s32.totalorder %s28, 7
      %p110 = por %p108, %p109
      %p111 = scmp.ne.s32.totalorder %s100, %s101
      %p112 = scmp.eq.s32.totalorder %s28, 0
      %p113 = por %p111, %p112
      %p114 = scmp.ne.s32.totalorder %s100, %s101
      %p115 = scmp.eq.s32.totalorder %s29, 7
      %p116 = por %p114, %p115
      %p118 = scmp.ne.s32.totalorder %s101, %s117
      %p119 = scmp.eq.s32.totalorder %s29, 0
      %p120 = por %p118, %p119
      %s121 = ssub.s32 %s31, %s38
      %p122 = scmp.eq.s32.totalorder %s121, 0
      %s124 = sadd.s32 %s123, 1
      %s125 = scalar_select %p122, %s123, %s124
      %p128 = pneg %p122
      %p129 = scmp.eq.s32.totalorder %s23, 7
      %p130 = por %p128, %p129
      %p131 = scmp.ne.s32.totalorder %s123, %s126
      %p132 = scmp.eq.s32.totalorder %s23, 0
      %p133 = por %p131, %p132
      %p134 = scmp.ne.s32.totalorder %s123, %s126
      %p135 = scmp.eq.s32.totalorder %s28, 7
      %p136 = por %p134, %p135
      %p137 = scmp.ne.s32.totalorder %s126, %s127
      %p138 = scmp.eq.s32.totalorder %s28, 0
      %p139 = por %p137, %p138
      %p140 = scmp.ne.s32.totalorder %s126, %s127
      %p141 = scmp.eq.s32.totalorder %s29, 7
      %p142 = por %p140, %p141
      %p144 = scmp.ne.s32.totalorder %s127, %s143
      %p145 = scmp.eq.s32.totalorder %s29, 0
      %p146 = por %p144, %p145
      %s148 = sadd.s32 %s147, 1
      %p151 = scmp.eq.s32.totalorder %s23, 7
      %p152 = scmp.ne.s32.totalorder %s147, %s149
      %p153 = scmp.eq.s32.totalorder %s23, 0
      %p154 = por %p152, %p153
      %p155 = scmp.ne.s32.totalorder %s147, %s149
      %p156 = scmp.eq.s32.totalorder %s28, 7
      %p157 = por %p155, %p156
      %p158 = scmp.ne.s32.totalorder %s149, %s150
      %p159 = scmp.eq.s32.totalorder %s28, 0
      %p160 = por %p158, %p159
      %p161 = scmp.ne.s32.totalorder %s149, %s150
      %p162 = scmp.eq.s32.totalorder %s29, 7
      %p163 = por %p161, %p162
      %p165 = scmp.ne.s32.totalorder %s150, %s164
      %p166 = scmp.eq.s32.totalorder %s29, 0
      %p167 = por %p165, %p166
      %s168 = ssub.s32 %s30, %s42
      %p169 = scmp.eq.s32.totalorder %s168, 0
      %s171 = sadd.s32 %s170, 1
      %s172 = scalar_select %p169, %s170, %s171
      %p175 = pneg %p169
      %p176 = scmp.eq.s32.totalorder %s23, 7
      %p177 = por %p175, %p176
      %p178 = scmp.ne.s32.totalorder %s170, %s173
      %p179 = scmp.eq.s32.totalorder %s23, 0
      %p180 = por %p178, %p179
      %p181 = scmp.ne.s32.totalorder %s170, %s173
      %p182 = scmp.eq.s32.totalorder %s28, 7
      %p183 = por %p181, %p182
      %p184 = scmp.ne.s32.totalorder %s173, %s174
      %p185 = scmp.eq.s32.totalorder %s28, 0
      %p186 = por %p184, %p185
      %p187 = scmp.ne.s32.totalorder %s173, %s174
      %p188 = scmp.eq.s32.totalorder %s29, 7
      %p189 = por %p187, %p188
      %p191 = scmp.ne.s32.totalorder %s174, %s190
      %p192 = scmp.eq.s32.totalorder %s29, 0
      %p193 = por %p191, %p192
      %p194 = scmp.le.s32.totalorder 1, %s23
      %p195 = scmp.lt.s32.totalorder %s23, 9
      %p196 = pnand %p194, %p195
      %p197 = pneg %p196
      // Predicated region
      $region9: #{tpu_custom_call.1} parent=5 // pred_check
        _
      $region10: #{tpu_custom_call.1} parent=5 // pred_check_branch
        %199 = sbr.rel (%p196) target = $region12
      $region11: #{tpu_custom_call.1} parent=5 // pred_region
        %s200 = ssub.s32 %s23, 1
        // Predicated region
        $region13: #{tpu_custom_call.1} parent=11 // pred_check
          %p201 = pneg %p160
        $region14: #{tpu_custom_call.1} parent=11 // pred_check_branch
          %203 = sbr.rel (%p201) target = $region16
        $region15: #{tpu_custom_call.1} parent=11 // pred_region
          _
        $region16: #{tpu_custom_call.1} parent=11 // pred_fallthru
          _
      $region12: #{tpu_custom_call.1} parent=5 // pred_fallthru
        _
      %p204 = scmp.lt.s32.totalorder %s23, 8
      // Predicated region
      $region17: #{tpu_custom_call.1} parent=5 // pred_check
        %p205 = pneg %p204
      $region18: #{tpu_custom_call.1} parent=5 // pred_check_branch
        %207 = sbr.rel (%p205) target = $region20
      $region19: #{tpu_custom_call.1} parent=5 // pred_region
        // Predicated region
        $region21: #{tpu_custom_call.1} parent=19 // pred_check
          %p208 = pneg %p55
        $region22: #{tpu_custom_call.1} parent=19 // pred_check_branch
          %210 = sbr.rel (%p208) target = $region24
        $region23: #{tpu_custom_call.1} parent=19 // pred_region
          %s211 = sand.u32 %s45, 1
          %s212 = scalar_lea.sflag [#allocation4], %s211
          %s213 = sand.u32 %s45, 1
          %s214 = smul.addr %s213, 16
          %s215 = scalar_lea.vmem [#allocation3], %s214
          %s216 = smul.u32 2, %s30
          %218 = vsyncadd %s212, 0
          %s219 = smul.addr %s216, 8
          %s220 = scalar_lea.hbm %s0, %s219
          %s221 = sshll.u32 %s220, 4
          %s222 = int_to_ptr.hbm [resolvable:$true] %s221
          %s223 = sshll.u32 %s215, 4
          %s224 = int_to_ptr.vmem [resolvable:$true] %s223
          %229 = dma.hbm_to_vmem [thread:$0]  %s222, 256, %s224, %s212, 128, 128, 8
        $region24: #{tpu_custom_call.1} parent=19 // pred_fallthru
          _
        // Predicated region
        $region25: #{tpu_custom_call.1} parent=19 // pred_check
          %p230 = pneg %p81
        $region26: #{tpu_custom_call.1} parent=19 // pred_check_branch
          %232 = sbr.rel (%p230) target = $region28
        $region27: #{tpu_custom_call.1} parent=19 // pred_region
          %s233 = sand.u32 %s23, 1
          %s234 = scalar_lea.sflag [#allocation7], %s233
          %s235 = sand.u32 %s71, 1
          %s236 = smul.addr %s235, 128
          %s237 = scalar_lea.vmem [#allocation6], %s236
          %239 = vsyncadd %s234, 0
          %s240 = smul.addr %s31, 8
          %s241 = scalar_lea.hbm %s1, %s240
          %s242 = sshll.u32 %s241, 4
          %s243 = int_to_ptr.hbm [resolvable:$true] %s242
          %s244 = sshll.u32 %s237, 4
          %s245 = int_to_ptr.vmem [resolvable:$true] %s244
          %250 = dma.hbm_to_vmem [thread:$0]  %s243, 2048, %s245, %s234, 512, 128, 8
        $region28: #{tpu_custom_call.1} parent=19 // pred_fallthru
          _
        // Predicated region
        $region29: #{tpu_custom_call.1} parent=19 // pred_check
          %p251 = pneg %p107
        $region30: #{tpu_custom_call.1} parent=19 // pred_check_branch
          %253 = sbr.rel (%p251) target = $region32
        $region31: #{tpu_custom_call.1} parent=19 // pred_region
          %s254 = sand.u32 %s23, 1
          %s255 = scalar_lea.sflag [#allocation7], %s254
          %s256 = sand.u32 %s97, 1
          %s257 = scalar_lea.vmem [#allocation8], %s256
          %259 = vsyncadd %s255, 0
          %s260 = scalar_lea.hbm %s2, %s31
          %s262 = sshll.u32 %s260, 4
          %s263 = int_to_ptr.hbm [resolvable:$true] %s262
          %s264 = sshll.u32 %s257, 4
          %s265 = int_to_ptr.vmem [resolvable:$true] %s264
          %267 = dma.hbm_to_vmem [thread:$0]  %s263, 16, %s265, %s255
        $region32: #{tpu_custom_call.1} parent=19 // pred_fallthru
          _
        // Predicated region
        $region33: #{tpu_custom_call.1} parent=19 // pred_check
          %p268 = pneg %p133
        $region34: #{tpu_custom_call.1} parent=19 // pred_check_branch
          %270 = sbr.rel (%p268) target = $region36
        $region35: #{tpu_custom_call.1} parent=19 // pred_region
          %s271 = sand.u32 %s123, 1
          %s272 = scalar_lea.sflag [#allocation10], %s271
          %s273 = sand.u32 %s123, 1
          %s274 = smul.addr %s273, 128
          %s275 = scalar_lea.vmem [#allocation9], %s274
          %s276 = smul.u32 16, %s31
          %278 = vsyncadd %s272, 0
          %s279 = smul.addr %s276, 8
          %s280 = scalar_lea.hbm %s3, %s279
          %s281 = sshll.u32 %s280, 4
          %s282 = int_to_ptr.hbm [resolvable:$true] %s281
          %s283 = sshll.u32 %s275, 4
          %s284 = int_to_ptr.vmem [resolvable:$true] %s283
          %289 = dma.hbm_to_vmem [thread:$0]  %s282, 2048, %s284, %s272, 128, 128, 8
        $region36: #{tpu_custom_call.1} parent=19 // pred_fallthru
          _
      $region20: #{tpu_custom_call.1} parent=5 // pred_fallthru
        _
      %p290 = scmp.le.s32.totalorder 1, %s23
      %p291 = scmp.lt.s32.totalorder %s23, 9
      %p292 = pnand %p290, %p291
      %p293 = pneg %p292
      // Predicated region
      $region37: #{tpu_custom_call.1} parent=5 // pred_check
        _
      $region38: #{tpu_custom_call.1} parent=5 // pred_check_branch
        %295 = sbr.rel (%p292) target = $region40
      $region39: #{tpu_custom_call.1} parent=5 // pred_region
        %s296 = ssub.s32 %s23, 1
        %s297 = sand.u32 %s48, 1
        %s298 = scalar_lea.sflag [#allocation4], %s297
        %s299 = sand.u32 %s48, 1
        %s300 = smul.addr %s299, 16
        %s301 = scalar_lea.vmem [#allocation3], %s300
        // Predicated region
        $region41: #{tpu_custom_call.1} parent=39 // pred_check
          %p302 = pneg %p61
        $region42: #{tpu_custom_call.1} parent=39 // pred_check_branch
          %304 = sbr.rel (%p302) target = $region44
        $region43: #{tpu_custom_call.1} parent=39 // pred_region
          %306 = dma.done %s298, 256
        $region44: #{tpu_custom_call.1} parent=39 // pred_fallthru
          _
        %s307 = sand.u32 %s28, 1
        %s308 = scalar_lea.sflag [#allocation7], %s307
        %s309 = sand.u32 %s74, 1
        %s310 = smul.addr %s309, 128
        %s311 = scalar_lea.vmem [#allocation6], %s310
        // Predicated region
        $region45: #{tpu_custom_call.1} parent=39 // pred_check
          %p312 = pneg %p87
        $region46: #{tpu_custom_call.1} parent=39 // pred_check_branch
          %314 = sbr.rel (%p312) target = $region48
        $region47: #{tpu_custom_call.1} parent=39 // pred_region
          %316 = dma.done %s308, 2048
        $region48: #{tpu_custom_call.1} parent=39 // pred_fallthru
          _
        %s317 = sand.u32 %s28, 1
        %s318 = scalar_lea.sflag [#allocation7], %s317
        %s319 = sand.u32 %s100, 1
        %s320 = scalar_lea.vmem [#allocation8], %s319
        // Predicated region
        $region49: #{tpu_custom_call.1} parent=39 // pred_check
          %p321 = pneg %p113
        $region50: #{tpu_custom_call.1} parent=39 // pred_check_branch
          %323 = sbr.rel (%p321) target = $region52
        $region51: #{tpu_custom_call.1} parent=39 // pred_region
          %325 = dma.done %s318, 16
        $region52: #{tpu_custom_call.1} parent=39 // pred_fallthru
          _
        %s326 = sand.u32 %s126, 1
        %s327 = scalar_lea.sflag [#allocation10], %s326
        %s328 = sand.u32 %s126, 1
        %s329 = smul.addr %s328, 128
        %s330 = scalar_lea.vmem [#allocation9], %s329
        // Predicated region
        $region53: #{tpu_custom_call.1} parent=39 // pred_check
          %p331 = pneg %p139
        $region54: #{tpu_custom_call.1} parent=39 // pred_check_branch
          %333 = sbr.rel (%p331) target = $region56
        $region55: #{tpu_custom_call.1} parent=39 // pred_region
          %335 = dma.done %s327, 2048
        $region56: #{tpu_custom_call.1} parent=39 // pred_fallthru
          _
        %s336 = sand.u32 %s48, 1
        %s337 = scalar_lea.sflag [#allocation4], %s336
        %s338 = sand.u32 %s48, 1
        %s339 = smul.addr %s338, 16
        %s340 = scalar_lea.vmem [#allocation3], %s339
        %p341 = pneg %p61
        %p342 = pneg %p58
        %s343 = sand.u32 %s28, 1
        %s344 = scalar_lea.sflag [#allocation7], %s343
        %s345 = sand.u32 %s74, 1
        %s346 = smul.addr %s345, 128
        %s347 = scalar_lea.vmem [#allocation6], %s346
        %p348 = pneg %p87
        %p349 = pneg %p84
        %s350 = sand.u32 %s28, 1
        %s351 = scalar_lea.sflag [#allocation7], %s350
        %s352 = sand.u32 %s100, 1
        %s353 = scalar_lea.vmem [#allocation8], %s352
        %p354 = pneg %p113
        %p355 = pneg %p110
        %s356 = sand.u32 %s126, 1
        %s357 = scalar_lea.sflag [#allocation10], %s356
        %s358 = sand.u32 %s126, 1
        %s359 = smul.addr %s358, 128
        %s360 = scalar_lea.vmem [#allocation9], %s359
        %p361 = pneg %p139
        %p362 = pneg %p136
        %p363 = pneg %p160
        %p364 = pneg %p157
        %p365 = pneg %p186
        %p366 = pneg %p183
        %s367 = sand.u32 %s173, 1
        %s368 = scalar_lea.sflag [#allocation5], %s367
        %s369 = sand.u32 %s173, 1
        %s370 = smul.addr %s369, 16
        %s371 = scalar_lea.vmem [#allocation11], %s370
        %s372 = smul.u32 2, %s32
        %s373 = smul.u32 16, %s33
        %s374 = smul.u32 2, %s32
        %p375 = scmp.eq.s32.totalorder %s33, 0
        // Predicated region
        $region57: #{tpu_custom_call.1} parent=39 // pred_check
          %p376 = pneg %p375
        $region58: #{tpu_custom_call.1} parent=39 // pred_check_branch
          %378 = sbr.rel (%p376) target = $region60
        $region59: #{tpu_custom_call.1} parent=39 // pred_region
          %379 = vst [vmem:[#allocation2] sm:$0xff] 0.0
          %380 = vst [vmem:[#allocation2 + $0x8] sm:$0xff] 0.0
        $region60: #{tpu_custom_call.1} parent=39 // pred_fallthru
          _
        %v381 = vld [vmem:[%s301] sm:$0xff]
        %v382 = vld [vmem:[%s301 + $0x8] sm:$0xff]
        %v383 = vld [vmem:[%s311] sm:$0xff]
        %v384 = vld [vmem:[%s311 + $0x8] sm:$0xff]
        %v385 = vld [vmem:[%s311 + $0x10] sm:$0xff]
        %v386 = vld [vmem:[%s311 + $0x18] sm:$0xff]
        %v387 = vld [vmem:[%s311 + $0x20] sm:$0xff]
        %v388 = vld [vmem:[%s311 + $0x28] sm:$0xff]
        %v389 = vld [vmem:[%s311 + $0x30] sm:$0xff]
        %v390 = vld [vmem:[%s311 + $0x38] sm:$0xff]
        %v391 = vld [vmem:[%s311 + $0x40] sm:$0xff]
        %v392 = vld [vmem:[%s311 + $0x48] sm:$0xff]
        %v393 = vld [vmem:[%s311 + $0x50] sm:$0xff]
        %v394 = vld [vmem:[%s311 + $0x58] sm:$0xff]
        %v395 = vld [vmem:[%s311 + $0x60] sm:$0xff]
        %v396 = vld [vmem:[%s311 + $0x68] sm:$0xff]
        %v397 = vld [vmem:[%s311 + $0x70] sm:$0xff]
        %v398 = vld [vmem:[%s311 + $0x78] sm:$0xff]
        %v399 = vld [vmem:[%s320] sm:$0x1]
        %v401 = vperm.slane %v399, 0
        %403 = vmatpush.msra.mxu0 %v398
        %404 = vmatpush.msra.mxu0 %v397
        %405 = vmatpush.msra.mxu0 %v396
        %406 = vmatpush.msra.mxu0 %v395
        %407 = vmatpush.msra.mxu0 %v394
        %408 = vmatpush.msra.mxu0 %v393
        %409 = vmatpush.msra.mxu0 %v392
        %410 = vmatpush.msra.mxu0 %v391
        %411 = vmatpush.msra.mxu0 %v390
        %412 = vmatpush.msra.mxu0 %v389
        %413 = vmatpush.msra.mxu0 %v388
        %414 = vmatpush.msra.mxu0 %v387
        %415 = vmatpush.msra.mxu0 %v386
        %416 = vmatpush.msra.mxu0 %v385
        %417 = vmatpush.msra.mxu0 %v384
        %418 = vmatpush.msra.mxu0 %v383
        %419 = vmatmul.f32.gmra.mxu0 %v381
        %v420 = vpop.f32.mrf.mxu0
        %v421 = vadd.f32 %v401, %v420
        %422 = vmatmul.f32.gmra.mxu0 %v382
        %v423 = vpop.f32.mrf.mxu0
        %v424 = vadd.f32 %v401, %v423
        %425 = vdwg.mxu0
        %v426 = vmul.f32 %v421, 0.5
        %v427 = vmul.f32 %v424, 0.5
        %v428 = vmul.f32 %v421, 0.70710677
        %v429 = vmul.f32 %v424, 0.70710677
        %v430 = vmul.f32 %v428, %v428
        %v431 = vmin.f32 16.0, %v430
        %v432 = vmul.f32 %v431, 2.1237322e-06
        %v433 = vadd.f32 %v432, 0.00028619796
        %v434 = vmul.f32 %v431, %v433
        %v435 = vadd.f32 %v434, 0.0036580483
        %v436 = vmul.f32 %v431, %v435
        %v437 = vadd.f32 %v436, 0.05243302
        %v438 = vmul.f32 %v431, %v437
        %v439 = vadd.f32 %v438, 0.18741608
        %v440 = vmul.f32 %v431, %v439
        %v441 = vadd.f32 %v440, 1.1283791
        %v442 = vmul.f32 %v428, %v441
        %v443 = vmul.f32 %v431, 3.8918573e-05
        %v444 = vadd.f32 %v443, 0.001143296
        %v445 = vmul.f32 %v431, %v444
        %v446 = vadd.f32 %v445, 0.014752088
        %v447 = vmul.f32 %v431, %v446
        %v448 = vadd.f32 %v447, 0.112945676
        %v449 = vmul.f32 %v431, %v448
        %v450 = vadd.f32 %v449, 0.4994258
        %v451 = vmul.f32 %v431, %v450
        %v452 = vadd.f32 %v451, 1.0
        %v453 = vrcp.pop %v452
        %v454 = vmul.f32 %v452, %v453
        %v455 = vsub.f32 1.0, %v454
        %v456 = vmul.f32 %v453, %v455
        %v457 = vadd.f32 %v453, %v456
        %vm458 = vweird.f32 %v452
        %vm459 = vweird.f32 %v453
        %vm460 = vmor %vm458, %vm459
        %v461 = vsel %vm460, %v453, %v457
        %v462 = vand.u32 2147483647, %v452
        %vm463 = vcmp.eq.f32.partialorder %v462, 8.507059e+37
        %v464 = vand.u32 %v452, 2147483648
        %v465 = vor.u32 1.1754944e-38, %v464
        %v466 = vsel %vm463, %v465, %v461
        %v467 = vmul.f32 %v442, %v466
        %v468 = vmin.f32 %v467, 1.0
        %v469 = vmax.f32 %v468, -1.0
        %v470 = vmul.f32 %v429, %v429
        %v471 = vmin.f32 16.0, %v470
        %v472 = vmul.f32 %v471, 2.1237322e-06
        %v473 = vadd.f32 %v472, 0.00028619796
        %v474 = vmul.f32 %v471, %v473
        %v475 = vadd.f32 %v474, 0.0036580483
        %v476 = vmul.f32 %v471, %v475
        %v477 = vadd.f32 %v476, 0.05243302
        %v478 = vmul.f32 %v471, %v477
        %v479 = vadd.f32 %v478, 0.18741608
        %v480 = vmul.f32 %v471, %v479
        %v481 = vadd.f32 %v480, 1.1283791
        %v482 = vmul.f32 %v429, %v481
        %v483 = vmul.f32 %v471, 3.8918573e-05
        %v484 = vadd.f32 %v483, 0.001143296
        %v485 = vmul.f32 %v471, %v484
        %v486 = vadd.f32 %v485, 0.014752088
        %v487 = vmul.f32 %v471, %v486
        %v488 = vadd.f32 %v487, 0.112945676
        %v489 = vmul.f32 %v471, %v488
        %v490 = vadd.f32 %v489, 0.4994258
        %v491 = vmul.f32 %v471, %v490
        %v492 = vadd.f32 %v491, 1.0
        %v493 = vrcp.pop %v492
        %v494 = vmul.f32 %v492, %v493
        %v495 = vsub.f32 1.0, %v494
        %v496 = vmul.f32 %v493, %v495
        %v497 = vadd.f32 %v493, %v496
        %vm498 = vweird.f32 %v492
        %vm499 = vweird.f32 %v493
        %vm500 = vmor %vm498, %vm499
        %v501 = vsel %vm500, %v493, %v497
        %v502 = vand.u32 2147483647, %v492
        %vm503 = vcmp.eq.f32.partialorder %v502, 8.507059e+37
        %v504 = vand.u32 %v492, 2147483648
        %v505 = vor.u32 1.1754944e-38, %v504
        %v506 = vsel %vm503, %v505, %v501
        %v507 = vmul.f32 %v482, %v506
        %v508 = vmin.f32 %v507, 1.0
        %v509 = vmax.f32 %v508, -1.0
        %v510 = vadd.f32 %v469, 1.0
        %v511 = vadd.f32 %v509, 1.0
        %v512 = vmul.f32 %v426, %v510
        %v513 = vmul.f32 %v427, %v511
        %v514 = vld [vmem:[#allocation2] sm:$0xff]
        %v515 = vld [vmem:[#allocation2 + $0x8] sm:$0xff]
        %v516 = vld [vmem:[%s330] sm:$0xff]
        %v517 = vld [vmem:[%s330 + $0x8] sm:$0xff]
        %v518 = vld [vmem:[%s330 + $0x10] sm:$0xff]
        %v519 = vld [vmem:[%s330 + $0x18] sm:$0xff]
        %v520 = vld [vmem:[%s330 + $0x20] sm:$0xff]
        %v521 = vld [vmem:[%s330 + $0x28] sm:$0xff]
        %v522 = vld [vmem:[%s330 + $0x30] sm:$0xff]
        %v523 = vld [vmem:[%s330 + $0x38] sm:$0xff]
        %v524 = vld [vmem:[%s330 + $0x40] sm:$0xff]
        %v525 = vld [vmem:[%s330 + $0x48] sm:$0xff]
        %v526 = vld [vmem:[%s330 + $0x50] sm:$0xff]
        %v527 = vld [vmem:[%s330 + $0x58] sm:$0xff]
        %v528 = vld [vmem:[%s330 + $0x60] sm:$0xff]
        %v529 = vld [vmem:[%s330 + $0x68] sm:$0xff]
        %v530 = vld [vmem:[%s330 + $0x70] sm:$0xff]
        %v531 = vld [vmem:[%s330 + $0x78] sm:$0xff]
        %532 = vmatpush.msra.mxu0 %v531
        %533 = vmatpush.msra.mxu0 %v530
        %534 = vmatpush.msra.mxu0 %v529
        %535 = vmatpush.msra.mxu0 %v528
        %536 = vmatpush.msra.mxu0 %v527
        %537 = vmatpush.msra.mxu0 %v526
        %538 = vmatpush.msra.mxu0 %v525
        %539 = vmatpush.msra.mxu0 %v524
        %540 = vmatpush.msra.mxu0 %v523
        %541 = vmatpush.msra.mxu0 %v522
        %542 = vmatpush.msra.mxu0 %v521
        %543 = vmatpush.msra.mxu0 %v520
        %544 = vmatpush.msra.mxu0 %v519
        %545 = vmatpush.msra.mxu0 %v518
        %546 = vmatpush.msra.mxu0 %v517
        %547 = vmatpush.msra.mxu0 %v516
        %548 = vmatmul.f32.gmra.mxu0 %v512
        %v549 = vpop.f32.mrf.mxu0
        %v550 = vadd.f32 0.0, %v549
        %551 = vmatmul.f32.gmra.mxu0 %v513
        %v552 = vpop.f32.mrf.mxu0
        %v553 = vadd.f32 0.0, %v552
        %554 = vdwg.mxu0
        %v555 = vadd.f32 %v514, %v550
        %v556 = vadd.f32 %v515, %v553
        %557 = vst [vmem:[#allocation2] sm:$0xff] %v555
        %558 = vst [vmem:[#allocation2 + $0x8] sm:$0xff] %v556
        %p559 = scmp.eq.s32.totalorder %s33, 3
        // Predicated region
        $region61: #{tpu_custom_call.1} parent=39 // pred_check
          %p560 = pneg %p559
        $region62: #{tpu_custom_call.1} parent=39 // pred_check_branch
          %562 = sbr.rel (%p560) target = $region64
        $region63: #{tpu_custom_call.1} parent=39 // pred_region
          %v563 = vld [vmem:[#allocation2] sm:$0xff]
          %v564 = vld [vmem:[#allocation2 + $0x8] sm:$0xff]
          %v565 = vld [vmem:[%s4] sm:$0x1]
          %v567 = vperm.slane %v565, 0
          %v569 = vadd.f32 %v563, %v567
          %v570 = vadd.f32 %v564, %v567
          %571 = vst [vmem:[%s371] sm:$0xff] %v569
          %572 = vst [vmem:[%s371 + $0x8] sm:$0xff] %v570
        $region64: #{tpu_custom_call.1} parent=39 // pred_fallthru
          _
        %s573 = sand.u32 %s173, 1
        %s574 = scalar_lea.sflag [#allocation5], %s573
        %s575 = sand.u32 %s173, 1
        %s576 = smul.addr %s575, 16
        %s577 = scalar_lea.vmem [#allocation11], %s576
        // Predicated region
        $region65: #{tpu_custom_call.1} parent=39 // pred_check
          %p578 = pneg %p183
        $region66: #{tpu_custom_call.1} parent=39 // pred_check_branch
          %580 = sbr.rel (%p578) target = $region68
        $region67: #{tpu_custom_call.1} parent=39 // pred_region
          %s581 = smul.u32 2, %s32
          %583 = vsyncadd %s574, 0
          %s584 = smul.addr %s581, 8
          %s585 = scalar_lea.hbm %s5, %s584
          %s586 = sshll.u32 %s577, 4
          %s587 = int_to_ptr.vmem [resolvable:$true] %s586
          %s588 = sshll.u32 %s585, 4
          %s589 = int_to_ptr.hbm [resolvable:$true] %s588
          %594 = dma.vmem_to_hbm [thread:$0]  %s587, 256, %s589, %s574, 128, 128, 8
        $region68: #{tpu_custom_call.1} parent=39 // pred_fallthru
          _
      $region40: #{tpu_custom_call.1} parent=5 // pred_fallthru
        _
      %p595 = scmp.le.s32.totalorder 2, %s23
      // Predicated region
      $region69: #{tpu_custom_call.1} parent=5 // pred_check
        %p596 = pneg %p595
      $region70: #{tpu_custom_call.1} parent=5 // pred_check_branch
        %598 = sbr.rel (%p596) target = $region72
      $region71: #{tpu_custom_call.1} parent=5 // pred_region
        %s599 = ssub.s32 %s23, 2
        // Predicated region
        $region73: #{tpu_custom_call.1} parent=71 // pred_check
          %p600 = pneg %p189
        $region74: #{tpu_custom_call.1} parent=71 // pred_check_branch
          %602 = sbr.rel (%p600) target = $region76
        $region75: #{tpu_custom_call.1} parent=71 // pred_region
          %s603 = sand.u32 %s174, 1
          %s604 = scalar_lea.sflag [#allocation5], %s603
          %s605 = sand.u32 %s174, 1
          %s606 = smul.addr %s605, 16
          %s607 = scalar_lea.vmem [#allocation11], %s606
          %609 = dma.done %s604, 256
        $region76: #{tpu_custom_call.1} parent=71 // pred_fallthru
          _
      $region72: #{tpu_custom_call.1} parent=5 // pred_fallthru
        _
    $region6: #{tpu_custom_call.1} parent=1 // loop_footer
      %s27 = sadd.s32 1, %s23
    $region7: #{tpu_custom_call.1} parent=1 // loop_footer_branch
      %22 = sbr.rel target = $region3
    $region8: #{tpu_custom_call.1} parent=1 // loop_exit
      _
    %610 = vsyncpa [#allocation4], 1
    %s611 = scalar_lea.sflag [#allocation4], 1
    %612 = vsyncpa %s611, 1
    %613 = vsyncpa [#allocation7], 1
    %s614 = scalar_lea.sflag [#allocation7], 1
    %615 = vsyncpa %s614, 1
    %616 = vsyncpa [#allocation10], 1
    %s617 = scalar_lea.sflag [#allocation10], 1
    %618 = vsyncpa %s617, 1
    %619 = vsyncpa [#allocation5], 1
    %s620 = scalar_lea.sflag [#allocation5], 1
    %621 = vsyncpa %s620, 1

</llo_original>
